<compile_context>
chip_gen: v7x
topology: tpu7x:2x2x1
jax: 0.10.0
libtpu: 0.0.40
codegen_flags: <defaults>
</compile_context>

<pallas_src>
import functools

import jax
import jax.numpy as jnp
from jax import lax
from jax.experimental import pallas as pl
from jax.experimental.pallas import tpu as pltpu

LN_EPS = 1e-12


def _bert_embeddings_kernel(ids_ref,      # SMEM (N,) int32           (scalar prefetch, pre-clamped)
                            tt_ref,       # VMEM (TT, 1) int32
                            word_hbm,     # HBM  (V, H) table dtype   (pl.ANY)
                            pos_ref,      # VMEM (TT, H)
                            type_ref,     # VMEM (T, H)
                            gamma_ref,    # VMEM (1, H) f32
                            beta_ref,     # VMEM (1, H) f32
                            out_ref,      # VMEM (TT, H) out dtype
                            gather_buf,   # VMEM (TT, H) table dtype  (scratch)
                            sem,          # DMA semaphores (NDMA,)
                            *, ndma, has_tt):
    TT, H = out_ref.shape
    T = type_ref.shape[0]

    base = pl.program_id(0) * TT

    def start_copy(idx, t):
        pltpu.make_async_copy(word_hbm.at[idx], gather_buf.at[t],
                              sem.at[t % ndma]).start()

    def wait_row(t):
        # Dummy static src index: wait only needs matching shape + semaphore.
        pltpu.make_async_copy(word_hbm.at[0], gather_buf.at[t],
                              sem.at[t % ndma]).wait()

    # ---- Pipelined per-row gather: keep up to `ndma` DMAs in flight. ----
    for t in range(ndma):                                   # prime the ring
        start_copy(ids_ref[base + t], t)

    steady = TT - ndma
    if steady > 0:
        def steady_body(t, carry):
            # Read the next id from SMEM BEFORE the wait (sst->sld forwarding).
            nxt = ids_ref[base + ndma + t]
            wait_row(t)
            start_copy(nxt, t + ndma)
            return carry
        lax.fori_loop(0, steady, steady_body, 0,
                      unroll=(True if steady <= 32 else 8))

    for t in range(steady, TT):                             # drain the ring
        wait_row(t)

    # ---- Sum + LayerNorm (all math in f32). ----
    words = gather_buf[...].astype(jnp.float32)             # (TT, H)
    positions = pos_ref[...].astype(jnp.float32)            # (TT, H)

    row0 = type_ref[pl.ds(0, 1), :].astype(jnp.float32)     # (1, H)
    if (not has_tt) or T == 1:
        types = row0                                         # broadcasts in the add
    elif T == 2:
        row1 = type_ref[pl.ds(1, 1), :].astype(jnp.float32)
        types = jnp.where(tt_ref[...] == 1, row1, row0)      # (TT, H) VPU select
    else:
        tts = tt_ref[...]
        types = jnp.broadcast_to(row0, (TT, H))
        for k in range(1, T):
            row_k = type_ref[pl.ds(k, 1), :].astype(jnp.float32)
            types = jnp.where(tts == k, row_k, types)

    emb = words + positions + types                          # (TT, H) f32

    mean = jnp.mean(emb, axis=-1, keepdims=True)
    var = jnp.mean((emb - mean) ** 2, axis=-1, keepdims=True)
    normed = (emb - mean) * jax.lax.rsqrt(var + LN_EPS)
    out_ref[...] = (normed * gamma_ref[...] + beta_ref[...]).astype(out_ref.dtype)


def bert_embeddings(input_ids, token_type_ids, word_table, pos_table,
                    type_table, gamma, beta, *, out_dtype=jnp.float32):
    B, S = input_ids.shape
    V, H = word_table.shape
    T = type_table.shape[0]
    max_pos = pos_table.shape[0]
    if S > max_pos:
        raise ValueError(f"seq_length {S} > max_position_embeddings {max_pos}")

    has_tt = token_type_ids is not None
    if not has_tt:
        token_type_ids = jnp.zeros_like(input_ids)

    N = B * S

    # Token tile: largest multiple-of-8 divisor of S (so a tile never crosses a
    # batch row and positions are a contiguous table slice), capped at 512, but
    # preferring a choice that leaves >= 2 grid steps so both v7x TCs get work.
    # (On single-TC v5e/v6e the 512 cap could be raised to 1024-2048.)
    candidates = [c for c in (512, 256, 128, 64, 32, 16, 8) if S % c == 0]
    if not candidates:
        raise ValueError("seq_length must be a multiple of 8")
    TT = next((c for c in candidates if N // c >= 2), candidates[-1])

    NDMA = min(32, TT)            # gather DMA ring depth (perf review: 16-32)
    n_pos_blocks = S // TT

    # Clamp ids in the wrapper so the per-row descriptor issue inside the kernel
    # carries no scalar clamp work and a bad id can never cause an OOB HBM read.
    ids_flat = jnp.clip(input_ids.reshape(N), 0, V - 1).astype(jnp.int32)
    tt_flat = token_type_ids.reshape(N, 1).astype(jnp.int32)
    gamma2 = gamma.reshape(1, H).astype(jnp.float32)
    beta2 = beta.reshape(1, H).astype(jnp.float32)

    grid_spec = pltpu.PrefetchScalarGridSpec(
        num_scalar_prefetch=1,                     # ids -> SMEM, drive DMA addresses
        grid=(N // TT,),
        in_specs=[
            pl.BlockSpec((TT, 1), lambda i, ids: (i, 0)),                 # token types
            pl.BlockSpec(memory_space=pl.ANY),                            # word table (HBM)
            pl.BlockSpec((TT, H), lambda i, ids: (i % n_pos_blocks, 0)),  # positions
            pl.BlockSpec((T, H), lambda i, ids: (0, 0)),                  # type table
            pl.BlockSpec((1, H), lambda i, ids: (0, 0)),                  # gamma
            pl.BlockSpec((1, H), lambda i, ids: (0, 0)),                  # beta
        ],
        out_specs=pl.BlockSpec((TT, H), lambda i, ids: (i, 0)),
        scratch_shapes=[
            pltpu.VMEM((TT, H), word_table.dtype),      # gathered word rows
            pltpu.SemaphoreType.DMA((NDMA,)),           # gather DMA ring
        ],
    )

    out_flat = pl.pallas_call(
        functools.partial(_bert_embeddings_kernel, ndma=NDMA, has_tt=has_tt),
        out_shape=jax.ShapeDtypeStruct((N, H), out_dtype),
        grid_spec=grid_spec,
        compiler_params=pltpu.CompilerParams(
            dimension_semantics=("parallel",),           # independent token tiles
            vmem_limit_bytes=32 * 1024 * 1024),          # per-tile residency << 64 MiB (v7x)
    )(ids_flat, tt_flat, word_table, pos_table, type_table, gamma2, beta2)

    return out_flat.reshape(B, S, H)


if __name__ == "__main__":
    # Small synthetic config (vocab_size, hidden_size, max_position_embeddings,
    # type_vocab_size).  H=128 keeps output stores lane-dense (real BERT H=768
    # is also a multiple of 128).
    B, S, H = 2, 8, 128
    VOCAB, MAX_POS, TYPE_VOCAB = 64, 16, 2

    key = jax.random.PRNGKey(0)
    k1, k2, k3, k4, k5, k6, k7 = jax.random.split(key, 7)

    word_table = (0.02 * jax.random.normal(k1, (VOCAB, H))).astype(jnp.float32)
    pos_table = (0.02 * jax.random.normal(k2, (MAX_POS, H))).astype(jnp.float32)
    type_table = (0.02 * jax.random.normal(k3, (TYPE_VOCAB, H))).astype(jnp.float32)
    gamma = (1.0 + 0.1 * jax.random.normal(k6, (H,))).astype(jnp.float32)
    beta = (0.05 * jax.random.normal(k7, (H,))).astype(jnp.float32)

    input_ids = jax.random.randint(k4, (B, S), 0, VOCAB, dtype=jnp.int32)
    token_type_ids = jax.random.randint(k5, (B, S), 0, TYPE_VOCAB, dtype=jnp.int32)

    out = bert_embeddings(input_ids, token_type_ids, word_table, pos_table,
                          type_table, gamma, beta)
    out = jax.block_until_ready(out)

    # Pure-JAX reference (dropout is identity in eval mode).
    words_ref = word_table[input_ids].astype(jnp.float32)
    pos_r = jnp.broadcast_to(pos_table[:S].astype(jnp.float32)[None], (B, S, H))
    types_ref = type_table[token_type_ids].astype(jnp.float32)
    emb = words_ref + pos_r + types_ref
    mean = emb.mean(-1, keepdims=True)
    var = ((emb - mean) ** 2).mean(-1, keepdims=True)
    ref = (emb - mean) / jnp.sqrt(var + LN_EPS) * gamma + beta

    assert out.shape == (B, S, H) and out.dtype == jnp.float32
    assert jnp.allclose(out, ref, atol=1e-5, rtol=1e-5), "mismatch vs reference"

    print("KERNEL_OK")
</pallas_src>

<mosaic_0001>
module attributes {stable_mosaic.version = 11 : i64} {
  func.func @_bert_embeddings_kernel(%arg0: i32, %arg1: memref<16xi32, #tpu.memory_space<smem>>, %arg2: memref<8x1xi32, #tpu.memory_space<vmem>>, %arg3: memref<64x128xf32, #tpu.memory_space<any>>, %arg4: memref<8x128xf32, #tpu.memory_space<vmem>>, %arg5: memref<2x128xf32, #tpu.memory_space<vmem>>, %arg6: memref<1x128xf32, #tpu.memory_space<vmem>>, %arg7: memref<1x128xf32, #tpu.memory_space<vmem>>, %arg8: memref<8x128xf32, #tpu.memory_space<vmem>>, %arg9: memref<8x128xf32, #tpu.memory_space<vmem>>, %arg10: memref<8x!tpu.dma_semaphore, #tpu.memory_space<semaphore_mem>>) attributes {dimension_semantics = [#tpu.dimension_semantics<parallel>], iteration_bounds = array<i64: 2>, scalar_prefetch = 1 : i64, scratch_operands = 2 : i64, tpu.core_type = #tpu.core_type<tc>, window_params = [{transform_indices = @transform_0, window_bounds = array<i64: 8, 1>}, {}, {transform_indices = @transform_2, window_bounds = array<i64: 8, 128>}, {pipeline_mode = #tpu.pipeline_mode<synchronous>, transform_indices = @transform_3, window_bounds = array<i64: 2, 128>}, {pipeline_mode = #tpu.pipeline_mode<synchronous>, transform_indices = @transform_4, window_bounds = array<i64: 1, 128>}, {pipeline_mode = #tpu.pipeline_mode<synchronous>, transform_indices = @transform_5, window_bounds = array<i64: 1, 128>}, {transform_indices = @transform_6, window_bounds = array<i64: 8, 128>}]} {
    %c8_i32 = arith.constant 8 : i32
    %0 = arith.muli %arg0, %c8_i32 : i32
    %c0_i32 = arith.constant 0 : i32
    %1 = arith.addi %0, %c0_i32 : i32
    %2 = arith.index_cast %1 : i32 to index
    %3 = memref.load %arg1[%2] : memref<16xi32, #tpu.memory_space<smem>>
    %c0_i32_0 = arith.constant 0 : i32
    %c0_i32_1 = arith.constant 0 : i32
    %c0_i32_2 = arith.constant 0 : i32
    %4 = tpu.memref_slice %arg3[%3, %c0_i32_2] : memref<64x128xf32, #tpu.memory_space<any>> -> memref<1x128xf32, #tpu.memory_space<any>>
    %5 = tpu.memref_squeeze %4 : memref<1x128xf32, #tpu.memory_space<any>> -> memref<128xf32, #tpu.memory_space<any>>
    %c0_i32_3 = arith.constant 0 : i32
    %6 = tpu.memref_slice %arg9[%c0_i32_0, %c0_i32_3] : memref<8x128xf32, #tpu.memory_space<vmem>> -> memref<1x128xf32, #tpu.memory_space<vmem>>
    %7 = tpu.memref_squeeze %6 : memref<1x128xf32, #tpu.memory_space<vmem>> -> memref<128xf32, #tpu.memory_space<vmem>>
    %8 = tpu.memref_slice %arg10[%c0_i32_1] : memref<8x!tpu.dma_semaphore, #tpu.memory_space<semaphore_mem>> -> memref<1x!tpu.dma_semaphore, #tpu.memory_space<semaphore_mem>>
    %9 = tpu.memref_squeeze %8 : memref<1x!tpu.dma_semaphore, #tpu.memory_space<semaphore_mem>> -> memref<!tpu.dma_semaphore, #tpu.memory_space<semaphore_mem>>
    tpu.enqueue_dma source(%5 : memref<128xf32, #tpu.memory_space<any>>) target(%7 : memref<128xf32, #tpu.memory_space<vmem>>) target_semaphore(%9 : memref<!tpu.dma_semaphore, #tpu.memory_space<semaphore_mem>>)
    %c1_i32 = arith.constant 1 : i32
    %10 = arith.addi %0, %c1_i32 : i32
    %11 = arith.index_cast %10 : i32 to index
    %12 = memref.load %arg1[%11] : memref<16xi32, #tpu.memory_space<smem>>
    %c1_i32_4 = arith.constant 1 : i32
    %c1_i32_5 = arith.constant 1 : i32
    %c0_i32_6 = arith.constant 0 : i32
    %13 = tpu.memref_slice %arg3[%12, %c0_i32_6] : memref<64x128xf32, #tpu.memory_space<any>> -> memref<1x128xf32, #tpu.memory_space<any>>
    %14 = tpu.memref_squeeze %13 : memref<1x128xf32, #tpu.memory_space<any>> -> memref<128xf32, #tpu.memory_space<any>>
    %c0_i32_7 = arith.constant 0 : i32
    %15 = tpu.memref_slice %arg9[%c1_i32_4, %c0_i32_7] : memref<8x128xf32, #tpu.memory_space<vmem>> -> memref<1x128xf32, #tpu.memory_space<vmem>>
    %16 = tpu.memref_squeeze %15 : memref<1x128xf32, #tpu.memory_space<vmem>> -> memref<128xf32, #tpu.memory_space<vmem>>
    %17 = tpu.memref_slice %arg10[%c1_i32_5] : memref<8x!tpu.dma_semaphore, #tpu.memory_space<semaphore_mem>> -> memref<1x!tpu.dma_semaphore, #tpu.memory_space<semaphore_mem>>
    %18 = tpu.memref_squeeze %17 : memref<1x!tpu.dma_semaphore, #tpu.memory_space<semaphore_mem>> -> memref<!tpu.dma_semaphore, #tpu.memory_space<semaphore_mem>>
    tpu.enqueue_dma source(%14 : memref<128xf32, #tpu.memory_space<any>>) target(%16 : memref<128xf32, #tpu.memory_space<vmem>>) target_semaphore(%18 : memref<!tpu.dma_semaphore, #tpu.memory_space<semaphore_mem>>)
    %c2_i32 = arith.constant 2 : i32
    %19 = arith.addi %0, %c2_i32 : i32
    %20 = arith.index_cast %19 : i32 to index
    %21 = memref.load %arg1[%20] : memref<16xi32, #tpu.memory_space<smem>>
    %c2_i32_8 = arith.constant 2 : i32
    %c2_i32_9 = arith.constant 2 : i32
    %c0_i32_10 = arith.constant 0 : i32
    %22 = tpu.memref_slice %arg3[%21, %c0_i32_10] : memref<64x128xf32, #tpu.memory_space<any>> -> memref<1x128xf32, #tpu.memory_space<any>>
    %23 = tpu.memref_squeeze %22 : memref<1x128xf32, #tpu.memory_space<any>> -> memref<128xf32, #tpu.memory_space<any>>
    %c0_i32_11 = arith.constant 0 : i32
    %24 = tpu.memref_slice %arg9[%c2_i32_8, %c0_i32_11] : memref<8x128xf32, #tpu.memory_space<vmem>> -> memref<1x128xf32, #tpu.memory_space<vmem>>
    %25 = tpu.memref_squeeze %24 : memref<1x128xf32, #tpu.memory_space<vmem>> -> memref<128xf32, #tpu.memory_space<vmem>>
    %26 = tpu.memref_slice %arg10[%c2_i32_9] : memref<8x!tpu.dma_semaphore, #tpu.memory_space<semaphore_mem>> -> memref<1x!tpu.dma_semaphore, #tpu.memory_space<semaphore_mem>>
    %27 = tpu.memref_squeeze %26 : memref<1x!tpu.dma_semaphore, #tpu.memory_space<semaphore_mem>> -> memref<!tpu.dma_semaphore, #tpu.memory_space<semaphore_mem>>
    tpu.enqueue_dma source(%23 : memref<128xf32, #tpu.memory_space<any>>) target(%25 : memref<128xf32, #tpu.memory_space<vmem>>) target_semaphore(%27 : memref<!tpu.dma_semaphore, #tpu.memory_space<semaphore_mem>>)
    %c3_i32 = arith.constant 3 : i32
    %28 = arith.addi %0, %c3_i32 : i32
    %29 = arith.index_cast %28 : i32 to index
    %30 = memref.load %arg1[%29] : memref<16xi32, #tpu.memory_space<smem>>
    %c3_i32_12 = arith.constant 3 : i32
    %c3_i32_13 = arith.constant 3 : i32
    %c0_i32_14 = arith.constant 0 : i32
    %31 = tpu.memref_slice %arg3[%30, %c0_i32_14] : memref<64x128xf32, #tpu.memory_space<any>> -> memref<1x128xf32, #tpu.memory_space<any>>
    %32 = tpu.memref_squeeze %31 : memref<1x128xf32, #tpu.memory_space<any>> -> memref<128xf32, #tpu.memory_space<any>>
    %c0_i32_15 = arith.constant 0 : i32
    %33 = tpu.memref_slice %arg9[%c3_i32_12, %c0_i32_15] : memref<8x128xf32, #tpu.memory_space<vmem>> -> memref<1x128xf32, #tpu.memory_space<vmem>>
    %34 = tpu.memref_squeeze %33 : memref<1x128xf32, #tpu.memory_space<vmem>> -> memref<128xf32, #tpu.memory_space<vmem>>
    %35 = tpu.memref_slice %arg10[%c3_i32_13] : memref<8x!tpu.dma_semaphore, #tpu.memory_space<semaphore_mem>> -> memref<1x!tpu.dma_semaphore, #tpu.memory_space<semaphore_mem>>
    %36 = tpu.memref_squeeze %35 : memref<1x!tpu.dma_semaphore, #tpu.memory_space<semaphore_mem>> -> memref<!tpu.dma_semaphore, #tpu.memory_space<semaphore_mem>>
    tpu.enqueue_dma source(%32 : memref<128xf32, #tpu.memory_space<any>>) target(%34 : memref<128xf32, #tpu.memory_space<vmem>>) target_semaphore(%36 : memref<!tpu.dma_semaphore, #tpu.memory_space<semaphore_mem>>)
    %c4_i32 = arith.constant 4 : i32
    %37 = arith.addi %0, %c4_i32 : i32
    %38 = arith.index_cast %37 : i32 to index
    %39 = memref.load %arg1[%38] : memref<16xi32, #tpu.memory_space<smem>>
    %c4_i32_16 = arith.constant 4 : i32
    %c4_i32_17 = arith.constant 4 : i32
    %c0_i32_18 = arith.constant 0 : i32
    %40 = tpu.memref_slice %arg3[%39, %c0_i32_18] : memref<64x128xf32, #tpu.memory_space<any>> -> memref<1x128xf32, #tpu.memory_space<any>>
    %41 = tpu.memref_squeeze %40 : memref<1x128xf32, #tpu.memory_space<any>> -> memref<128xf32, #tpu.memory_space<any>>
    %c0_i32_19 = arith.constant 0 : i32
    %42 = tpu.memref_slice %arg9[%c4_i32_16, %c0_i32_19] : memref<8x128xf32, #tpu.memory_space<vmem>> -> memref<1x128xf32, #tpu.memory_space<vmem>>
    %43 = tpu.memref_squeeze %42 : memref<1x128xf32, #tpu.memory_space<vmem>> -> memref<128xf32, #tpu.memory_space<vmem>>
    %44 = tpu.memref_slice %arg10[%c4_i32_17] : memref<8x!tpu.dma_semaphore, #tpu.memory_space<semaphore_mem>> -> memref<1x!tpu.dma_semaphore, #tpu.memory_space<semaphore_mem>>
    %45 = tpu.memref_squeeze %44 : memref<1x!tpu.dma_semaphore, #tpu.memory_space<semaphore_mem>> -> memref<!tpu.dma_semaphore, #tpu.memory_space<semaphore_mem>>
    tpu.enqueue_dma source(%41 : memref<128xf32, #tpu.memory_space<any>>) target(%43 : memref<128xf32, #tpu.memory_space<vmem>>) target_semaphore(%45 : memref<!tpu.dma_semaphore, #tpu.memory_space<semaphore_mem>>)
    %c5_i32 = arith.constant 5 : i32
    %46 = arith.addi %0, %c5_i32 : i32
    %47 = arith.index_cast %46 : i32 to index
    %48 = memref.load %arg1[%47] : memref<16xi32, #tpu.memory_space<smem>>
    %c5_i32_20 = arith.constant 5 : i32
    %c5_i32_21 = arith.constant 5 : i32
    %c0_i32_22 = arith.constant 0 : i32
    %49 = tpu.memref_slice %arg3[%48, %c0_i32_22] : memref<64x128xf32, #tpu.memory_space<any>> -> memref<1x128xf32, #tpu.memory_space<any>>
    %50 = tpu.memref_squeeze %49 : memref<1x128xf32, #tpu.memory_space<any>> -> memref<128xf32, #tpu.memory_space<any>>
    %c0_i32_23 = arith.constant 0 : i32
    %51 = tpu.memref_slice %arg9[%c5_i32_20, %c0_i32_23] : memref<8x128xf32, #tpu.memory_space<vmem>> -> memref<1x128xf32, #tpu.memory_space<vmem>>
    %52 = tpu.memref_squeeze %51 : memref<1x128xf32, #tpu.memory_space<vmem>> -> memref<128xf32, #tpu.memory_space<vmem>>
    %53 = tpu.memref_slice %arg10[%c5_i32_21] : memref<8x!tpu.dma_semaphore, #tpu.memory_space<semaphore_mem>> -> memref<1x!tpu.dma_semaphore, #tpu.memory_space<semaphore_mem>>
    %54 = tpu.memref_squeeze %53 : memref<1x!tpu.dma_semaphore, #tpu.memory_space<semaphore_mem>> -> memref<!tpu.dma_semaphore, #tpu.memory_space<semaphore_mem>>
    tpu.enqueue_dma source(%50 : memref<128xf32, #tpu.memory_space<any>>) target(%52 : memref<128xf32, #tpu.memory_space<vmem>>) target_semaphore(%54 : memref<!tpu.dma_semaphore, #tpu.memory_space<semaphore_mem>>)
    %c6_i32 = arith.constant 6 : i32
    %55 = arith.addi %0, %c6_i32 : i32
    %56 = arith.index_cast %55 : i32 to index
    %57 = memref.load %arg1[%56] : memref<16xi32, #tpu.memory_space<smem>>
    %c6_i32_24 = arith.constant 6 : i32
    %c6_i32_25 = arith.constant 6 : i32
    %c0_i32_26 = arith.constant 0 : i32
    %58 = tpu.memref_slice %arg3[%57, %c0_i32_26] : memref<64x128xf32, #tpu.memory_space<any>> -> memref<1x128xf32, #tpu.memory_space<any>>
    %59 = tpu.memref_squeeze %58 : memref<1x128xf32, #tpu.memory_space<any>> -> memref<128xf32, #tpu.memory_space<any>>
    %c0_i32_27 = arith.constant 0 : i32
    %60 = tpu.memref_slice %arg9[%c6_i32_24, %c0_i32_27] : memref<8x128xf32, #tpu.memory_space<vmem>> -> memref<1x128xf32, #tpu.memory_space<vmem>>
    %61 = tpu.memref_squeeze %60 : memref<1x128xf32, #tpu.memory_space<vmem>> -> memref<128xf32, #tpu.memory_space<vmem>>
    %62 = tpu.memref_slice %arg10[%c6_i32_25] : memref<8x!tpu.dma_semaphore, #tpu.memory_space<semaphore_mem>> -> memref<1x!tpu.dma_semaphore, #tpu.memory_space<semaphore_mem>>
    %63 = tpu.memref_squeeze %62 : memref<1x!tpu.dma_semaphore, #tpu.memory_space<semaphore_mem>> -> memref<!tpu.dma_semaphore, #tpu.memory_space<semaphore_mem>>
    tpu.enqueue_dma source(%59 : memref<128xf32, #tpu.memory_space<any>>) target(%61 : memref<128xf32, #tpu.memory_space<vmem>>) target_semaphore(%63 : memref<!tpu.dma_semaphore, #tpu.memory_space<semaphore_mem>>)
    %c7_i32 = arith.constant 7 : i32
    %64 = arith.addi %0, %c7_i32 : i32
    %65 = arith.index_cast %64 : i32 to index
    %66 = memref.load %arg1[%65] : memref<16xi32, #tpu.memory_space<smem>>
    %c7_i32_28 = arith.constant 7 : i32
    %c7_i32_29 = arith.constant 7 : i32
    %c0_i32_30 = arith.constant 0 : i32
    %67 = tpu.memref_slice %arg3[%66, %c0_i32_30] : memref<64x128xf32, #tpu.memory_space<any>> -> memref<1x128xf32, #tpu.memory_space<any>>
    %68 = tpu.memref_squeeze %67 : memref<1x128xf32, #tpu.memory_space<any>> -> memref<128xf32, #tpu.memory_space<any>>
    %c0_i32_31 = arith.constant 0 : i32
    %69 = tpu.memref_slice %arg9[%c7_i32_28, %c0_i32_31] : memref<8x128xf32, #tpu.memory_space<vmem>> -> memref<1x128xf32, #tpu.memory_space<vmem>>
    %70 = tpu.memref_squeeze %69 : memref<1x128xf32, #tpu.memory_space<vmem>> -> memref<128xf32, #tpu.memory_space<vmem>>
    %71 = tpu.memref_slice %arg10[%c7_i32_29] : memref<8x!tpu.dma_semaphore, #tpu.memory_space<semaphore_mem>> -> memref<1x!tpu.dma_semaphore, #tpu.memory_space<semaphore_mem>>
    %72 = tpu.memref_squeeze %71 : memref<1x!tpu.dma_semaphore, #tpu.memory_space<semaphore_mem>> -> memref<!tpu.dma_semaphore, #tpu.memory_space<semaphore_mem>>
    tpu.enqueue_dma source(%68 : memref<128xf32, #tpu.memory_space<any>>) target(%70 : memref<128xf32, #tpu.memory_space<vmem>>) target_semaphore(%72 : memref<!tpu.dma_semaphore, #tpu.memory_space<semaphore_mem>>)
    %c0_i32_32 = arith.constant 0 : i32
    %c0_i32_33 = arith.constant 0 : i32
    %c0_i32_34 = arith.constant 0 : i32
    %c0_i32_35 = arith.constant 0 : i32
    %73 = tpu.memref_slice %arg3[%c0_i32_32, %c0_i32_35] : memref<64x128xf32, #tpu.memory_space<any>> -> memref<1x128xf32, #tpu.memory_space<any>>
    %74 = tpu.memref_squeeze %73 : memref<1x128xf32, #tpu.memory_space<any>> -> memref<128xf32, #tpu.memory_space<any>>
    %c0_i32_36 = arith.constant 0 : i32
    %75 = tpu.memref_slice %arg9[%c0_i32_33, %c0_i32_36] : memref<8x128xf32, #tpu.memory_space<vmem>> -> memref<1x128xf32, #tpu.memory_space<vmem>>
    %76 = tpu.memref_squeeze %75 : memref<1x128xf32, #tpu.memory_space<vmem>> -> memref<128xf32, #tpu.memory_space<vmem>>
    %77 = tpu.memref_slice %arg10[%c0_i32_34] : memref<8x!tpu.dma_semaphore, #tpu.memory_space<semaphore_mem>> -> memref<1x!tpu.dma_semaphore, #tpu.memory_space<semaphore_mem>>
    %78 = tpu.memref_squeeze %77 : memref<1x!tpu.dma_semaphore, #tpu.memory_space<semaphore_mem>> -> memref<!tpu.dma_semaphore, #tpu.memory_space<semaphore_mem>>
    tpu.wait_dma2 semaphore(%78 : memref<!tpu.dma_semaphore, #tpu.memory_space<semaphore_mem>>) src(%74 : memref<128xf32, #tpu.memory_space<any>>) dst(%76 : memref<128xf32, #tpu.memory_space<vmem>>)
    %c0_i32_37 = arith.constant 0 : i32
    %c1_i32_38 = arith.constant 1 : i32
    %c1_i32_39 = arith.constant 1 : i32
    %c0_i32_40 = arith.constant 0 : i32
    %79 = tpu.memref_slice %arg3[%c0_i32_37, %c0_i32_40] : memref<64x128xf32, #tpu.memory_space<any>> -> memref<1x128xf32, #tpu.memory_space<any>>
    %80 = tpu.memref_squeeze %79 : memref<1x128xf32, #tpu.memory_space<any>> -> memref<128xf32, #tpu.memory_space<any>>
    %c0_i32_41 = arith.constant 0 : i32
    %81 = tpu.memref_slice %arg9[%c1_i32_38, %c0_i32_41] : memref<8x128xf32, #tpu.memory_space<vmem>> -> memref<1x128xf32, #tpu.memory_space<vmem>>
    %82 = tpu.memref_squeeze %81 : memref<1x128xf32, #tpu.memory_space<vmem>> -> memref<128xf32, #tpu.memory_space<vmem>>
    %83 = tpu.memref_slice %arg10[%c1_i32_39] : memref<8x!tpu.dma_semaphore, #tpu.memory_space<semaphore_mem>> -> memref<1x!tpu.dma_semaphore, #tpu.memory_space<semaphore_mem>>
    %84 = tpu.memref_squeeze %83 : memref<1x!tpu.dma_semaphore, #tpu.memory_space<semaphore_mem>> -> memref<!tpu.dma_semaphore, #tpu.memory_space<semaphore_mem>>
    tpu.wait_dma2 semaphore(%84 : memref<!tpu.dma_semaphore, #tpu.memory_space<semaphore_mem>>) src(%80 : memref<128xf32, #tpu.memory_space<any>>) dst(%82 : memref<128xf32, #tpu.memory_space<vmem>>)
    %c0_i32_42 = arith.constant 0 : i32
    %c2_i32_43 = arith.constant 2 : i32
    %c2_i32_44 = arith.constant 2 : i32
    %c0_i32_45 = arith.constant 0 : i32
    %85 = tpu.memref_slice %arg3[%c0_i32_42, %c0_i32_45] : memref<64x128xf32, #tpu.memory_space<any>> -> memref<1x128xf32, #tpu.memory_space<any>>
    %86 = tpu.memref_squeeze %85 : memref<1x128xf32, #tpu.memory_space<any>> -> memref<128xf32, #tpu.memory_space<any>>
    %c0_i32_46 = arith.constant 0 : i32
    %87 = tpu.memref_slice %arg9[%c2_i32_43, %c0_i32_46] : memref<8x128xf32, #tpu.memory_space<vmem>> -> memref<1x128xf32, #tpu.memory_space<vmem>>
    %88 = tpu.memref_squeeze %87 : memref<1x128xf32, #tpu.memory_space<vmem>> -> memref<128xf32, #tpu.memory_space<vmem>>
    %89 = tpu.memref_slice %arg10[%c2_i32_44] : memref<8x!tpu.dma_semaphore, #tpu.memory_space<semaphore_mem>> -> memref<1x!tpu.dma_semaphore, #tpu.memory_space<semaphore_mem>>
    %90 = tpu.memref_squeeze %89 : memref<1x!tpu.dma_semaphore, #tpu.memory_space<semaphore_mem>> -> memref<!tpu.dma_semaphore, #tpu.memory_space<semaphore_mem>>
    tpu.wait_dma2 semaphore(%90 : memref<!tpu.dma_semaphore, #tpu.memory_space<semaphore_mem>>) src(%86 : memref<128xf32, #tpu.memory_space<any>>) dst(%88 : memref<128xf32, #tpu.memory_space<vmem>>)
    %c0_i32_47 = arith.constant 0 : i32
    %c3_i32_48 = arith.constant 3 : i32
    %c3_i32_49 = arith.constant 3 : i32
    %c0_i32_50 = arith.constant 0 : i32
    %91 = tpu.memref_slice %arg3[%c0_i32_47, %c0_i32_50] : memref<64x128xf32, #tpu.memory_space<any>> -> memref<1x128xf32, #tpu.memory_space<any>>
    %92 = tpu.memref_squeeze %91 : memref<1x128xf32, #tpu.memory_space<any>> -> memref<128xf32, #tpu.memory_space<any>>
    %c0_i32_51 = arith.constant 0 : i32
    %93 = tpu.memref_slice %arg9[%c3_i32_48, %c0_i32_51] : memref<8x128xf32, #tpu.memory_space<vmem>> -> memref<1x128xf32, #tpu.memory_space<vmem>>
    %94 = tpu.memref_squeeze %93 : memref<1x128xf32, #tpu.memory_space<vmem>> -> memref<128xf32, #tpu.memory_space<vmem>>
    %95 = tpu.memref_slice %arg10[%c3_i32_49] : memref<8x!tpu.dma_semaphore, #tpu.memory_space<semaphore_mem>> -> memref<1x!tpu.dma_semaphore, #tpu.memory_space<semaphore_mem>>
    %96 = tpu.memref_squeeze %95 : memref<1x!tpu.dma_semaphore, #tpu.memory_space<semaphore_mem>> -> memref<!tpu.dma_semaphore, #tpu.memory_space<semaphore_mem>>
    tpu.wait_dma2 semaphore(%96 : memref<!tpu.dma_semaphore, #tpu.memory_space<semaphore_mem>>) src(%92 : memref<128xf32, #tpu.memory_space<any>>) dst(%94 : memref<128xf32, #tpu.memory_space<vmem>>)
    %c0_i32_52 = arith.constant 0 : i32
    %c4_i32_53 = arith.constant 4 : i32
    %c4_i32_54 = arith.constant 4 : i32
    %c0_i32_55 = arith.constant 0 : i32
    %97 = tpu.memref_slice %arg3[%c0_i32_52, %c0_i32_55] : memref<64x128xf32, #tpu.memory_space<any>> -> memref<1x128xf32, #tpu.memory_space<any>>
    %98 = tpu.memref_squeeze %97 : memref<1x128xf32, #tpu.memory_space<any>> -> memref<128xf32, #tpu.memory_space<any>>
    %c0_i32_56 = arith.constant 0 : i32
    %99 = tpu.memref_slice %arg9[%c4_i32_53, %c0_i32_56] : memref<8x128xf32, #tpu.memory_space<vmem>> -> memref<1x128xf32, #tpu.memory_space<vmem>>
    %100 = tpu.memref_squeeze %99 : memref<1x128xf32, #tpu.memory_space<vmem>> -> memref<128xf32, #tpu.memory_space<vmem>>
    %101 = tpu.memref_slice %arg10[%c4_i32_54] : memref<8x!tpu.dma_semaphore, #tpu.memory_space<semaphore_mem>> -> memref<1x!tpu.dma_semaphore, #tpu.memory_space<semaphore_mem>>
    %102 = tpu.memref_squeeze %101 : memref<1x!tpu.dma_semaphore, #tpu.memory_space<semaphore_mem>> -> memref<!tpu.dma_semaphore, #tpu.memory_space<semaphore_mem>>
    tpu.wait_dma2 semaphore(%102 : memref<!tpu.dma_semaphore, #tpu.memory_space<semaphore_mem>>) src(%98 : memref<128xf32, #tpu.memory_space<any>>) dst(%100 : memref<128xf32, #tpu.memory_space<vmem>>)
    %c0_i32_57 = arith.constant 0 : i32
    %c5_i32_58 = arith.constant 5 : i32
    %c5_i32_59 = arith.constant 5 : i32
    %c0_i32_60 = arith.constant 0 : i32
    %103 = tpu.memref_slice %arg3[%c0_i32_57, %c0_i32_60] : memref<64x128xf32, #tpu.memory_space<any>> -> memref<1x128xf32, #tpu.memory_space<any>>
    %104 = tpu.memref_squeeze %103 : memref<1x128xf32, #tpu.memory_space<any>> -> memref<128xf32, #tpu.memory_space<any>>
    %c0_i32_61 = arith.constant 0 : i32
    %105 = tpu.memref_slice %arg9[%c5_i32_58, %c0_i32_61] : memref<8x128xf32, #tpu.memory_space<vmem>> -> memref<1x128xf32, #tpu.memory_space<vmem>>
    %106 = tpu.memref_squeeze %105 : memref<1x128xf32, #tpu.memory_space<vmem>> -> memref<128xf32, #tpu.memory_space<vmem>>
    %107 = tpu.memref_slice %arg10[%c5_i32_59] : memref<8x!tpu.dma_semaphore, #tpu.memory_space<semaphore_mem>> -> memref<1x!tpu.dma_semaphore, #tpu.memory_space<semaphore_mem>>
    %108 = tpu.memref_squeeze %107 : memref<1x!tpu.dma_semaphore, #tpu.memory_space<semaphore_mem>> -> memref<!tpu.dma_semaphore, #tpu.memory_space<semaphore_mem>>
    tpu.wait_dma2 semaphore(%108 : memref<!tpu.dma_semaphore, #tpu.memory_space<semaphore_mem>>) src(%104 : memref<128xf32, #tpu.memory_space<any>>) dst(%106 : memref<128xf32, #tpu.memory_space<vmem>>)
    %c0_i32_62 = arith.constant 0 : i32
    %c6_i32_63 = arith.constant 6 : i32
    %c6_i32_64 = arith.constant 6 : i32
    %c0_i32_65 = arith.constant 0 : i32
    %109 = tpu.memref_slice %arg3[%c0_i32_62, %c0_i32_65] : memref<64x128xf32, #tpu.memory_space<any>> -> memref<1x128xf32, #tpu.memory_space<any>>
    %110 = tpu.memref_squeeze %109 : memref<1x128xf32, #tpu.memory_space<any>> -> memref<128xf32, #tpu.memory_space<any>>
    %c0_i32_66 = arith.constant 0 : i32
    %111 = tpu.memref_slice %arg9[%c6_i32_63, %c0_i32_66] : memref<8x128xf32, #tpu.memory_space<vmem>> -> memref<1x128xf32, #tpu.memory_space<vmem>>
    %112 = tpu.memref_squeeze %111 : memref<1x128xf32, #tpu.memory_space<vmem>> -> memref<128xf32, #tpu.memory_space<vmem>>
    %113 = tpu.memref_slice %arg10[%c6_i32_64] : memref<8x!tpu.dma_semaphore, #tpu.memory_space<semaphore_mem>> -> memref<1x!tpu.dma_semaphore, #tpu.memory_space<semaphore_mem>>
    %114 = tpu.memref_squeeze %113 : memref<1x!tpu.dma_semaphore, #tpu.memory_space<semaphore_mem>> -> memref<!tpu.dma_semaphore, #tpu.memory_space<semaphore_mem>>
    tpu.wait_dma2 semaphore(%114 : memref<!tpu.dma_semaphore, #tpu.memory_space<semaphore_mem>>) src(%110 : memref<128xf32, #tpu.memory_space<any>>) dst(%112 : memref<128xf32, #tpu.memory_space<vmem>>)
    %c0_i32_67 = arith.constant 0 : i32
    %c7_i32_68 = arith.constant 7 : i32
    %c7_i32_69 = arith.constant 7 : i32
    %c0_i32_70 = arith.constant 0 : i32
    %115 = tpu.memref_slice %arg3[%c0_i32_67, %c0_i32_70] : memref<64x128xf32, #tpu.memory_space<any>> -> memref<1x128xf32, #tpu.memory_space<any>>
    %116 = tpu.memref_squeeze %115 : memref<1x128xf32, #tpu.memory_space<any>> -> memref<128xf32, #tpu.memory_space<any>>
    %c0_i32_71 = arith.constant 0 : i32
    %117 = tpu.memref_slice %arg9[%c7_i32_68, %c0_i32_71] : memref<8x128xf32, #tpu.memory_space<vmem>> -> memref<1x128xf32, #tpu.memory_space<vmem>>
    %118 = tpu.memref_squeeze %117 : memref<1x128xf32, #tpu.memory_space<vmem>> -> memref<128xf32, #tpu.memory_space<vmem>>
    %119 = tpu.memref_slice %arg10[%c7_i32_69] : memref<8x!tpu.dma_semaphore, #tpu.memory_space<semaphore_mem>> -> memref<1x!tpu.dma_semaphore, #tpu.memory_space<semaphore_mem>>
    %120 = tpu.memref_squeeze %119 : memref<1x!tpu.dma_semaphore, #tpu.memory_space<semaphore_mem>> -> memref<!tpu.dma_semaphore, #tpu.memory_space<semaphore_mem>>
    tpu.wait_dma2 semaphore(%120 : memref<!tpu.dma_semaphore, #tpu.memory_space<semaphore_mem>>) src(%116 : memref<128xf32, #tpu.memory_space<any>>) dst(%118 : memref<128xf32, #tpu.memory_space<vmem>>)
    %c0 = arith.constant 0 : index
    %c0_72 = arith.constant 0 : index
    %121 = vector.load %arg9[%c0, %c0_72] : memref<8x128xf32, #tpu.memory_space<vmem>>, vector<8x128xf32>
    %c0_73 = arith.constant 0 : index
    %c0_74 = arith.constant 0 : index
    %122 = vector.load %arg4[%c0_73, %c0_74] : memref<8x128xf32, #tpu.memory_space<vmem>>, vector<8x128xf32>
    %c0_75 = arith.constant 0 : index
    %c0_76 = arith.constant 0 : index
    %123 = vector.load %arg5[%c0_75, %c0_76] : memref<2x128xf32, #tpu.memory_space<vmem>>, vector<1x128xf32>
    %c1 = arith.constant 1 : index
    %c0_77 = arith.constant 0 : index
    %124 = vector.load %arg5[%c1, %c0_77] : memref<2x128xf32, #tpu.memory_space<vmem>>, vector<1x128xf32>
    %c0_78 = arith.constant 0 : index
    %c0_79 = arith.constant 0 : index
    %125 = vector.load %arg2[%c0_78, %c0_79] : memref<8x1xi32, #tpu.memory_space<vmem>>, vector<8x1xi32>
    %c1_i32_80 = arith.constant 1 : i32
    %126 = vector.broadcast %c1_i32_80 : i32 to vector<8x1xi32>
    %127 = arith.cmpi eq, %125, %126 : vector<8x1xi32>
    %128 = vector.shape_cast %127 : vector<8x1xi1> to vector<8x1xi1>
    %129 = vector.broadcast %128 : vector<8x1xi1> to vector<8x128xi1>
    %130 = vector.shape_cast %124 : vector<1x128xf32> to vector<1x128xf32>
    %131 = vector.broadcast %130 : vector<1x128xf32> to vector<8x128xf32>
    %132 = vector.shape_cast %123 : vector<1x128xf32> to vector<1x128xf32>
    %133 = vector.broadcast %132 : vector<1x128xf32> to vector<8x128xf32>
    %134 = arith.select %129, %131, %133 : vector<8x128xi1>, vector<8x128xf32>
    %135 = arith.addf %121, %122 : vector<8x128xf32>
    %136 = arith.addf %135, %134 : vector<8x128xf32>
    %cst = arith.constant dense<0.000000e+00> : vector<8xf32>
    %137 = vector.multi_reduction <add>, %136, %cst [1] : vector<8x128xf32> to vector<8xf32>
    %138 = vector.shape_cast %137 : vector<8xf32> to vector<8x1xf32>
    %cst_81 = arith.constant 1.280000e+02 : f32
    %139 = vector.broadcast %cst_81 : f32 to vector<8x1xf32>
    %140 = arith.divf %138, %139 : vector<8x1xf32>
    %141 = vector.broadcast %140 : vector<8x1xf32> to vector<8x128xf32>
    %142 = arith.subf %136, %141 : vector<8x128xf32>
    %143 = arith.mulf %142, %142 : vector<8x128xf32>
    %cst_82 = arith.constant dense<0.000000e+00> : vector<8xf32>
    %144 = vector.multi_reduction <add>, %143, %cst_82 [1] : vector<8x128xf32> to vector<8xf32>
    %145 = vector.shape_cast %144 : vector<8xf32> to vector<8x1xf32>
    %cst_83 = arith.constant 1.280000e+02 : f32
    %146 = vector.broadcast %cst_83 : f32 to vector<8x1xf32>
    %147 = arith.divf %145, %146 : vector<8x1xf32>
    %148 = vector.broadcast %140 : vector<8x1xf32> to vector<8x128xf32>
    %149 = arith.subf %136, %148 : vector<8x128xf32>
    %cst_84 = arith.constant 9.99999996E-13 : f32
    %150 = vector.broadcast %cst_84 : f32 to vector<8x1xf32>
    %151 = arith.addf %147, %150 : vector<8x1xf32>
    %152 = math.rsqrt %151 : vector<8x1xf32>
    %153 = vector.broadcast %152 : vector<8x1xf32> to vector<8x128xf32>
    %154 = arith.mulf %149, %153 : vector<8x128xf32>
    %c0_85 = arith.constant 0 : index
    %c0_86 = arith.constant 0 : index
    %155 = vector.load %arg6[%c0_85, %c0_86] : memref<1x128xf32, #tpu.memory_space<vmem>>, vector<1x128xf32>
    %156 = vector.broadcast %155 : vector<1x128xf32> to vector<8x128xf32>
    %157 = arith.mulf %154, %156 : vector<8x128xf32>
    %c0_87 = arith.constant 0 : index
    %c0_88 = arith.constant 0 : index
    %158 = vector.load %arg7[%c0_87, %c0_88] : memref<1x128xf32, #tpu.memory_space<vmem>>, vector<1x128xf32>
    %159 = vector.broadcast %158 : vector<1x128xf32> to vector<8x128xf32>
    %160 = arith.addf %157, %159 : vector<8x128xf32>
    %c0_89 = arith.constant 0 : index
    %c0_90 = arith.constant 0 : index
    %161 = vector.load %arg8[%c0_89, %c0_90] : memref<8x128xf32, #tpu.memory_space<vmem>>, vector<8x128xf32>
    tpu.vector_store %arg8[%c0_89, %c0_90], %160 {strides = array<i32>} : memref<8x128xf32, #tpu.memory_space<vmem>>, vector<8x128xf32>,
    return
  }
  func.func @transform_0(%arg0: i32, %arg1: memref<16xi32, #tpu.memory_space<smem>>) -> (i32, i32) {
    %c0_i32 = arith.constant 0 : i32
    %c0_i32_0 = arith.constant 0 : i32
    return %arg0, %c0_i32 : i32, i32
  }
  func.func @transform_2(%arg0: i32, %arg1: memref<16xi32, #tpu.memory_space<smem>>) -> (i32, i32) {
    %c1_i32 = arith.constant 1 : i32
    %c0_i32 = arith.constant 0 : i32
    %0 = arith.cmpi eq, %c1_i32, %c0_i32 : i32
    %c1_i32_0 = arith.constant 1 : i32
    %1 = arith.select %0, %c1_i32_0, %c1_i32 : i32
    %2 = arith.remsi %arg0, %1 : i32
    %c0_i32_1 = arith.constant 0 : i32
    %3 = arith.cmpi ne, %2, %c0_i32_1 : i32
    %c0_i32_2 = arith.constant 0 : i32
    %4 = arith.cmpi slt, %2, %c0_i32_2 : i32
    %c0_i32_3 = arith.constant 0 : i32
    %5 = arith.cmpi slt, %1, %c0_i32_3 : i32
    %6 = arith.xori %4, %5 : i1
    %7 = arith.andi %6, %3 : i1
    %8 = arith.addi %2, %1 : i32
    %9 = arith.select %7, %8, %2 : i32
    %c0_i32_4 = arith.constant 0 : i32
    %c0_i32_5 = arith.constant 0 : i32
    return %9, %c0_i32_4 : i32, i32
  }
  func.func @transform_3(%arg0: i32, %arg1: memref<16xi32, #tpu.memory_space<smem>>) -> (i32, i32) {
    %c0_i32 = arith.constant 0 : i32
    %c0_i32_0 = arith.constant 0 : i32
    %c0_i32_1 = arith.constant 0 : i32
    return %c0_i32, %c0_i32_0 : i32, i32
  }
  func.func @transform_4(%arg0: i32, %arg1: memref<16xi32, #tpu.memory_space<smem>>) -> (i32, i32) {
    %c0_i32 = arith.constant 0 : i32
    %c0_i32_0 = arith.constant 0 : i32
    %c0_i32_1 = arith.constant 0 : i32
    return %c0_i32, %c0_i32_0 : i32, i32
  }
  func.func @transform_5(%arg0: i32, %arg1: memref<16xi32, #tpu.memory_space<smem>>) -> (i32, i32) {
    %c0_i32 = arith.constant 0 : i32
    %c0_i32_0 = arith.constant 0 : i32
    %c0_i32_1 = arith.constant 0 : i32
    return %c0_i32, %c0_i32_0 : i32, i32
  }
  func.func @transform_6(%arg0: i32, %arg1: memref<16xi32, #tpu.memory_space<smem>>) -> (i32, i32) {
    %c0_i32 = arith.constant 0 : i32
    %c0_i32_0 = arith.constant 0 : i32
    return %arg0, %c0_i32 : i32, i32
  }
}

</mosaic_0001>

<llo_original>
// kernel: tpu_custom_call.1
$region0: #{tpu_custom_call.1}
  #allocation0 [shape = 'u32[]', space=smem, size = 0x4, offset = 0x4, fixed_abs, tag = 'smem constant byte address 0x4 - core index']
  #allocation1 [shape = 'u32[144,128]{1,0:T(1,128)}', space=vmem, size = 0x12000, scoped, tag = 'internal scratch']
  #allocation2 [shape = 'f32[8,128]{1,0:T(8,128)}', space=vmem, size = 0x1000, scoped, tag = 'scratch operand']
  #allocation3 [shape = 's32[8]{0}', space=sflag, size = 0x20, scoped, tag = 'scratch operand']
  #allocation4 [shape = 's32[1]{0}', space=sflag, size = 0x4, scoped, tag = 'scoped memory for tpu_custom_call.1']
  #allocation5 [shape = 'u8[512]{0}', space=smem, size = 0x200, scoped, tag = 'prefetched SMEM operand 0']
  #allocation8 [shape = 's32[]', space=sflag, size = 0x4, offset = 0, fixed_abs, tag = 'sflag constant byte address 0x0 - dummy sync flag']
  #allocation9 [shape = 's32[]', space=sflag, size = 0x4, offset = 0, fixed_abs, tag = 'sflag constant byte address 0x0 - dummy sync flag']
  #allocation10 [shape = 'u32[]', space=smem, size = 0x4, offset = 0x44, fixed_abs, tag = 'smem constant byte address 0x44 - assertion arg 0']
  #allocation11 [shape = 'u32[]', space=smem, size = 0x4, offset = 0x48, fixed_abs, tag = 'smem constant byte address 0x48 - assertion arg 1']
  #allocation12 [shape = 's32[]', space=sflag, size = 0x4, offset = 0, fixed_abs, tag = 'sflag constant byte address 0x0 - dummy sync flag']
  #allocation13 [shape = 's32[]', space=sflag, size = 0x4, offset = 0, fixed_abs, tag = 'sflag constant byte address 0x0 - dummy sync flag']
  #allocation14 [shape = 's32[]', space=sflag, size = 0x4, offset = 0, fixed_abs, tag = 'sflag constant byte address 0x0 - dummy sync flag']
  #allocation15 [shape = 's32[]', space=sflag, size = 0x4, offset = 0, fixed_abs, tag = 'sflag constant byte address 0x0 - dummy sync flag']
  #allocation16 [shape = 's32[]', space=sflag, size = 0x4, offset = 0, fixed_abs, tag = 'sflag constant byte address 0x0 - dummy sync flag']
  #allocation17 [shape = 's32[]', space=sflag, size = 0x4, offset = 0, fixed_abs, tag = 'sflag constant byte address 0x0 - dummy sync flag']
  #allocation18 [shape = 's32[]', space=sflag, size = 0x4, offset = 0, fixed_abs, tag = 'sflag constant byte address 0x0 - dummy sync flag']
  #allocation19 [shape = 's32[]', space=sflag, size = 0x4, offset = 0, fixed_abs, tag = 'sflag constant byte address 0x0 - dummy sync flag']
  #allocation20 [shape = 's32[]', space=sflag, size = 0x4, offset = 0, fixed_abs, tag = 'sflag constant byte address 0x0 - dummy sync flag']
  #allocation21 [shape = 's32[]', space=sflag, size = 0x4, offset = 0, fixed_abs, tag = 'sflag constant byte address 0x0 - dummy sync flag']
  #allocation22 [shape = 's32[]', space=sflag, size = 0x4, offset = 0, fixed_abs, tag = 'sflag constant byte address 0x0 - dummy sync flag']
  #allocation23 [shape = 's32[]', space=sflag, size = 0x4, offset = 0, fixed_abs, tag = 'sflag constant byte address 0x0 - dummy sync flag']
  #allocation24 [shape = 's32[]', space=sflag, size = 0x4, offset = 0, fixed_abs, tag = 'sflag constant byte address 0x0 - dummy sync flag']
  #allocation25 [shape = 's32[]', space=sflag, size = 0x4, offset = 0, fixed_abs, tag = 'sflag constant byte address 0x0 - dummy sync flag']
  %s0 = inlined_call_operand.vmem [shape: s32[16], index: 0, kind: input, shape index: {}]
  %s1 = inlined_call_operand.vmem [shape: s32[16,1], index: 1, kind: input, shape index: {}]
  %s2 = inlined_call_operand.hbm [shape: f32[64,128], index: 2, kind: input, shape index: {}]
  %s3 = inlined_call_operand.vmem [shape: f32[16,128], index: 3, kind: input, shape index: {}]
  %s4 = inlined_call_operand.vmem [shape: f32[2,128], index: 4, kind: input, shape index: {}]
  %s5 = inlined_call_operand.vmem [shape: f32[1,128], index: 5, kind: input, shape index: {}]
  %s6 = inlined_call_operand.vmem [shape: f32[1,128], index: 6, kind: input, shape index: {}]
  %s7 = inlined_call_operand.hbm [shape: f32[16,128], index: 7, kind: output, shape index: {}]
  %s8 = sld [smem:[#allocation0]]
  $region85: #{tpu_custom_call.1} parent=0
    _
  %s10 = ssub.s32 1, %s8
  %s11 = scalar_select 0, %s10, %s8
  %s12 = sshll.u32 %s0, 4
  %s13 = int_to_ptr.vmem [resolvable:$true] %s12
  %15 = dma.vmem_to_smem %s13, 16, [#allocation5], [#allocation4]
  %16 = dma.done [#allocation4], 16
  %17 = sfence
  $region1: #{tpu_custom_call.1} parent=0
    #allocation6 [shape = 'u8[8192]{0}', space=vmem, size = 0x2000, scoped, tag = 'output window, operand 0']
    #allocation7 [shape = 's32[2]{0}', space=sflag, size = 0x8, scoped, tag = 'scoped memory for tpu_custom_call.1']
    %18 = vsyncpa [#allocation7], 0
    %s19 = scalar_lea.sflag [#allocation7], 1
    %20 = vsyncpa %s19, 0
    loop: start=0, step=1, limit=4
    $region2: #{tpu_custom_call.1} parent=1 // loop_pre_header
      _
    $region3: #{tpu_custom_call.1} parent=1 // loop_header
      %s22 = sphi 0, %s26
      %p23 = scmp.ge.s32.totalorder %s22, 4
      %s32 = sphi 0, %s34
      %s35 = sphi 0, %s32
      %s36 = sphi 0, %s35
      %s52 = sphi 0, %s36
      %s56 = sphi 0, %s56
      %s58 = sphi 0, %s56
      %s59 = sphi 0, %s58
      %s73 = sphi 0, %s59
      %s77 = sphi 0, %s77
      %s79 = sphi 0, %s77
      %s80 = sphi 0, %s79
      %s94 = sphi 0, %s80
      %s98 = sphi 0, %s98
      %s100 = sphi 0, %s98
      %s101 = sphi 0, %s100
      %s115 = sphi 0, %s101
      %s119 = sphi 0, %s119
      %s121 = sphi 0, %s119
      %s122 = sphi 0, %s121
      %s136 = sphi 0, %s122
      %s142 = sphi 0, %s144
      %s145 = sphi 0, %s142
      %s146 = sphi 0, %s145
      %s162 = sphi 0, %s146
    $region4: #{tpu_custom_call.1} parent=1 // loop_header_branch
      %25 = sbr.rel (%p23) target = $region8
    $region5: #{tpu_custom_call.1} parent=1 // loop_body
      %s27 = ssub.s32 %s22, 1
      %s28 = ssub.s32 %s22, 2
      %s29 = sadd.s32 %s22, 1
      %s30 = ssub.s32 %s22, %s29
      %p31 = scmp.eq.s32.totalorder %s30, 0
      %s33 = sadd.s32 %s32, 1
      %s34 = scalar_select %p31, %s32, %s33
      %p37 = pneg %p31
      %p38 = scmp.eq.s32.totalorder %s22, 1
      %p39 = por %p37, %p38
      %p40 = scmp.ne.s32.totalorder %s32, %s35
      %p41 = scmp.eq.s32.totalorder %s22, 0
      %p42 = por %p40, %p41
      %p43 = scmp.ne.s32.totalorder %s32, %s35
      %p44 = scmp.eq.s32.totalorder %s27, 1
      %p45 = por %p43, %p44
      %p46 = scmp.ne.s32.totalorder %s35, %s36
      %p47 = scmp.eq.s32.totalorder %s27, 0
      %p48 = por %p46, %p47
      %p49 = scmp.ne.s32.totalorder %s35, %s36
      %p50 = scmp.eq.s32.totalorder %s28, 1
      %p51 = por %p49, %p50
      %p53 = scmp.ne.s32.totalorder %s36, %s52
      %p54 = scmp.eq.s32.totalorder %s28, 0
      %p55 = por %p53, %p54
      %s57 = sadd.s32 %s56, 1
      %p60 = scmp.eq.s32.totalorder %s22, 1
      %p61 = scmp.ne.s32.totalorder %s56, %s58
      %p62 = scmp.eq.s32.totalorder %s22, 0
      %p63 = por %p61, %p62
      %p64 = scmp.ne.s32.totalorder %s56, %s58
      %p65 = scmp.eq.s32.totalorder %s27, 1
      %p66 = por %p64, %p65
      %p67 = scmp.ne.s32.totalorder %s58, %s59
      %p68 = scmp.eq.s32.totalorder %s27, 0
      %p69 = por %p67, %p68
      %p70 = scmp.ne.s32.totalorder %s58, %s59
      %p71 = scmp.eq.s32.totalorder %s28, 1
      %p72 = por %p70, %p71
      %p74 = scmp.ne.s32.totalorder %s59, %s73
      %p75 = scmp.eq.s32.totalorder %s28, 0
      %p76 = por %p74, %p75
      %s78 = sadd.s32 %s77, 1
      %p81 = scmp.eq.s32.totalorder %s22, 1
      %p82 = scmp.ne.s32.totalorder %s77, %s79
      %p83 = scmp.eq.s32.totalorder %s22, 0
      %p84 = por %p82, %p83
      %p85 = scmp.ne.s32.totalorder %s77, %s79
      %p86 = scmp.eq.s32.totalorder %s27, 1
      %p87 = por %p85, %p86
      %p88 = scmp.ne.s32.totalorder %s79, %s80
      %p89 = scmp.eq.s32.totalorder %s27, 0
      %p90 = por %p88, %p89
      %p91 = scmp.ne.s32.totalorder %s79, %s80
      %p92 = scmp.eq.s32.totalorder %s28, 1
      %p93 = por %p91, %p92
      %p95 = scmp.ne.s32.totalorder %s80, %s94
      %p96 = scmp.eq.s32.totalorder %s28, 0
      %p97 = por %p95, %p96
      %s99 = sadd.s32 %s98, 1
      %p102 = scmp.eq.s32.totalorder %s22, 1
      %p103 = scmp.ne.s32.totalorder %s98, %s100
      %p104 = scmp.eq.s32.totalorder %s22, 0
      %p105 = por %p103, %p104
      %p106 = scmp.ne.s32.totalorder %s98, %s100
      %p107 = scmp.eq.s32.totalorder %s27, 1
      %p108 = por %p106, %p107
      %p109 = scmp.ne.s32.totalorder %s100, %s101
      %p110 = scmp.eq.s32.totalorder %s27, 0
      %p111 = por %p109, %p110
      %p112 = scmp.ne.s32.totalorder %s100, %s101
      %p113 = scmp.eq.s32.totalorder %s28, 1
      %p114 = por %p112, %p113
      %p116 = scmp.ne.s32.totalorder %s101, %s115
      %p117 = scmp.eq.s32.totalorder %s28, 0
      %p118 = por %p116, %p117
      %s120 = sadd.s32 %s119, 1
      %p123 = scmp.eq.s32.totalorder %s22, 1
      %p124 = scmp.ne.s32.totalorder %s119, %s121
      %p125 = scmp.eq.s32.totalorder %s22, 0
      %p126 = por %p124, %p125
      %p127 = scmp.ne.s32.totalorder %s119, %s121
      %p128 = scmp.eq.s32.totalorder %s27, 1
      %p129 = por %p127, %p128
      %p130 = scmp.ne.s32.totalorder %s121, %s122
      %p131 = scmp.eq.s32.totalorder %s27, 0
      %p132 = por %p130, %p131
      %p133 = scmp.ne.s32.totalorder %s121, %s122
      %p134 = scmp.eq.s32.totalorder %s28, 1
      %p135 = por %p133, %p134
      %p137 = scmp.ne.s32.totalorder %s122, %s136
      %p138 = scmp.eq.s32.totalorder %s28, 0
      %p139 = por %p137, %p138
      %s140 = ssub.s32 %s22, %s29
      %p141 = scmp.eq.s32.totalorder %s140, 0
      %s143 = sadd.s32 %s142, 1
      %s144 = scalar_select %p141, %s142, %s143
      %p147 = pneg %p141
      %p148 = scmp.eq.s32.totalorder %s22, 1
      %p149 = por %p147, %p148
      %p150 = scmp.ne.s32.totalorder %s142, %s145
      %p151 = scmp.eq.s32.totalorder %s22, 0
      %p152 = por %p150, %p151
      %p153 = scmp.ne.s32.totalorder %s142, %s145
      %p154 = scmp.eq.s32.totalorder %s27, 1
      %p155 = por %p153, %p154
      %p156 = scmp.ne.s32.totalorder %s145, %s146
      %p157 = scmp.eq.s32.totalorder %s27, 0
      %p158 = por %p156, %p157
      %p159 = scmp.ne.s32.totalorder %s145, %s146
      %p160 = scmp.eq.s32.totalorder %s28, 1
      %p161 = por %p159, %p160
      %p163 = scmp.ne.s32.totalorder %s146, %s162
      %p164 = scmp.eq.s32.totalorder %s28, 0
      %p165 = por %p163, %p164
      %p166 = scmp.le.s32.totalorder 1, %s22
      %p167 = scmp.lt.s32.totalorder %s22, 3
      %p168 = pnand %p166, %p167
      %p169 = pneg %p168
      // Predicated region
      $region9: #{tpu_custom_call.1} parent=5 // pred_check
        _
      $region10: #{tpu_custom_call.1} parent=5 // pred_check_branch
        %171 = sbr.rel (%p168) target = $region12
      $region11: #{tpu_custom_call.1} parent=5 // pred_region
        %s172 = ssub.s32 %s22, 1
        // Predicated region
        $region13: #{tpu_custom_call.1} parent=11 // pred_check
          %p173 = pneg %p69
        $region14: #{tpu_custom_call.1} parent=11 // pred_check_branch
          %175 = sbr.rel (%p173) target = $region16
        $region15: #{tpu_custom_call.1} parent=11 // pred_region
          _
        $region16: #{tpu_custom_call.1} parent=11 // pred_fallthru
          _
        // Predicated region
        $region17: #{tpu_custom_call.1} parent=11 // pred_check
          %p176 = pneg %p90
        $region18: #{tpu_custom_call.1} parent=11 // pred_check_branch
          %178 = sbr.rel (%p176) target = $region20
        $region19: #{tpu_custom_call.1} parent=11 // pred_region
          _
        $region20: #{tpu_custom_call.1} parent=11 // pred_fallthru
          _
        // Predicated region
        $region21: #{tpu_custom_call.1} parent=11 // pred_check
          %p179 = pneg %p111
        $region22: #{tpu_custom_call.1} parent=11 // pred_check_branch
          %181 = sbr.rel (%p179) target = $region24
        $region23: #{tpu_custom_call.1} parent=11 // pred_region
          _
        $region24: #{tpu_custom_call.1} parent=11 // pred_fallthru
          _
        // Predicated region
        $region25: #{tpu_custom_call.1} parent=11 // pred_check
          %p182 = pneg %p132
        $region26: #{tpu_custom_call.1} parent=11 // pred_check_branch
          %184 = sbr.rel (%p182) target = $region28
        $region27: #{tpu_custom_call.1} parent=11 // pred_region
          _
        $region28: #{tpu_custom_call.1} parent=11 // pred_fallthru
          _
      $region12: #{tpu_custom_call.1} parent=5 // pred_fallthru
        _
      %p185 = scmp.lt.s32.totalorder %s22, 2
      // Predicated region
      $region29: #{tpu_custom_call.1} parent=5 // pred_check
        %p186 = pneg %p185
      $region30: #{tpu_custom_call.1} parent=5 // pred_check_branch
        %188 = sbr.rel (%p186) target = $region32
      $region31: #{tpu_custom_call.1} parent=5 // pred_region
        // Predicated region
        $region33: #{tpu_custom_call.1} parent=31 // pred_check
          %p189 = pneg %p42
        $region34: #{tpu_custom_call.1} parent=31 // pred_check_branch
          %191 = sbr.rel (%p189) target = $region36
        $region35: #{tpu_custom_call.1} parent=31 // pred_region
          %p192 = scmp.lt.s32.totalorder %s22, 1
          %s193 = scalar_select %p192, %s22, 1
          %s194 = smul.addr %s193, 8
          %s195 = scalar_lea.vmem %s1, %s194
        $region36: #{tpu_custom_call.1} parent=31 // pred_fallthru
          _
      $region32: #{tpu_custom_call.1} parent=5 // pred_fallthru
        _
      %p196 = scmp.le.s32.totalorder 1, %s22
      %p197 = scmp.lt.s32.totalorder %s22, 3
      %p198 = pnand %p196, %p197
      %p199 = pneg %p198
      // Predicated region
      $region37: #{tpu_custom_call.1} parent=5 // pred_check
        _
      $region38: #{tpu_custom_call.1} parent=5 // pred_check_branch
        %201 = sbr.rel (%p198) target = $region40
      $region39: #{tpu_custom_call.1} parent=5 // pred_region
        %s202 = ssub.s32 %s22, 1
        %p203 = scmp.lt.s32.totalorder %s27, 1
        %s204 = scalar_select %p203, %s27, 1
        %s205 = smul.addr %s204, 8
        %s206 = scalar_lea.vmem %s1, %s205
        %p207 = pneg %p48
        %p208 = pneg %p45
        %p209 = pneg %p69
        %p210 = pneg %p66
        %p211 = pneg %p90
        %p212 = pneg %p87
        %p213 = pneg %p111
        %p214 = pneg %p108
        %p215 = pneg %p132
        %p216 = pneg %p129
        %p217 = pneg %p158
        %p218 = pneg %p155
        %s219 = sand.u32 %s145, 1
        %s220 = scalar_lea.sflag [#allocation7], %s219
        %s221 = sand.u32 %s145, 1
        %s222 = smul.addr %s221, 8
        %s223 = scalar_lea.vmem [#allocation6], %s222
        %p224 = scmp.lt.s32.totalorder %s27, 1
        %s225 = scalar_select %p224, %s27, 1
        %s226 = smul.addr %s225, 8
        %s227 = scalar_lea.vmem %s1, %s226
        %s228 = smul.u32 %s27, 8
        %s229 = sld [smem:[#allocation5 + %s228]]
        %s230 = smul.addr %s229, 16
        %s231 = scalar_lea.hbm %s2, %s230
        // Predicated region
        $region41: #{tpu_custom_call.1} parent=39 // pred_check
          _
        $region42: #{tpu_custom_call.1} parent=39 // pred_check_branch
          %233 = sbr.rel target = $region44
        $region43: #{tpu_custom_call.1} parent=39 // pred_region
          %234 = sst [smem:[#allocation10]] [#allocation9]
          %235 = sst [smem:[#allocation11]] [#allocation8]
        $region44: #{tpu_custom_call.1} parent=39 // pred_fallthru
          _
        %237 = shalt.err (0)
        %s239 = sshll.u32 [#allocation2], 4
        %s240 = int_to_ptr.vmem [resolvable:$true] %s239
        %242 = dma.hbm_to_vmem [thread:$0]  %s231, 16, %s240, [#allocation3]
        %s243 = sadd.s32 %s228, 1
        %s244 = sld [smem:[#allocation5 + %s243]]
        %s245 = smul.addr %s244, 16
        %s246 = scalar_lea.hbm %s2, %s245
        %s247 = scalar_lea.vmem [#allocation2], 1
        %s248 = scalar_lea.sflag [#allocation3], 1
        // Predicated region
        $region45: #{tpu_custom_call.1} parent=39 // pred_check
          _
        $region46: #{tpu_custom_call.1} parent=39 // pred_check_branch
          %250 = sbr.rel target = $region48
        $region47: #{tpu_custom_call.1} parent=39 // pred_region
          %251 = sst [smem:[#allocation10]] [#allocation13]
          %252 = sst [smem:[#allocation11]] [#allocation12]
        $region48: #{tpu_custom_call.1} parent=39 // pred_fallthru
          _
        %254 = shalt.err (0)
        %s256 = sshll.u32 %s247, 4
        %s257 = int_to_ptr.vmem [resolvable:$true] %s256
        %259 = dma.hbm_to_vmem [thread:$0]  %s246, 16, %s257, %s248
        %s260 = sadd.s32 %s228, 2
        %s261 = sld [smem:[#allocation5 + %s260]]
        %s262 = smul.addr %s261, 16
        %s263 = scalar_lea.hbm %s2, %s262
        %s264 = scalar_lea.vmem [#allocation2], 2
        %s265 = scalar_lea.sflag [#allocation3], 2
        // Predicated region
        $region49: #{tpu_custom_call.1} parent=39 // pred_check
          _
        $region50: #{tpu_custom_call.1} parent=39 // pred_check_branch
          %267 = sbr.rel target = $region52
        $region51: #{tpu_custom_call.1} parent=39 // pred_region
          %268 = sst [smem:[#allocation10]] [#allocation15]
          %269 = sst [smem:[#allocation11]] [#allocation14]
        $region52: #{tpu_custom_call.1} parent=39 // pred_fallthru
          _
        %271 = shalt.err (0)
        %s273 = sshll.u32 %s264, 4
        %s274 = int_to_ptr.vmem [resolvable:$true] %s273
        %276 = dma.hbm_to_vmem [thread:$0]  %s263, 16, %s274, %s265
        %s277 = sadd.s32 %s228, 3
        %s278 = sld [smem:[#allocation5 + %s277]]
        %s279 = smul.addr %s278, 16
        %s280 = scalar_lea.hbm %s2, %s279
        %s281 = scalar_lea.vmem [#allocation2], 3
        %s282 = scalar_lea.sflag [#allocation3], 3
        // Predicated region
        $region53: #{tpu_custom_call.1} parent=39 // pred_check
          _
        $region54: #{tpu_custom_call.1} parent=39 // pred_check_branch
          %284 = sbr.rel target = $region56
        $region55: #{tpu_custom_call.1} parent=39 // pred_region
          %285 = sst [smem:[#allocation10]] [#allocation17]
          %286 = sst [smem:[#allocation11]] [#allocation16]
        $region56: #{tpu_custom_call.1} parent=39 // pred_fallthru
          _
        %288 = shalt.err (0)
        %s290 = sshll.u32 %s281, 4
        %s291 = int_to_ptr.vmem [resolvable:$true] %s290
        %293 = dma.hbm_to_vmem [thread:$0]  %s280, 16, %s291, %s282
        %s294 = sadd.s32 %s228, 4
        %s295 = sld [smem:[#allocation5 + %s294]]
        %s296 = smul.addr %s295, 16
        %s297 = scalar_lea.hbm %s2, %s296
        %s298 = scalar_lea.vmem [#allocation2], 4
        %s299 = scalar_lea.sflag [#allocation3], 4
        // Predicated region
        $region57: #{tpu_custom_call.1} parent=39 // pred_check
          _
        $region58: #{tpu_custom_call.1} parent=39 // pred_check_branch
          %301 = sbr.rel target = $region60
        $region59: #{tpu_custom_call.1} parent=39 // pred_region
          %302 = sst [smem:[#allocation10]] [#allocation19]
          %303 = sst [smem:[#allocation11]] [#allocation18]
        $region60: #{tpu_custom_call.1} parent=39 // pred_fallthru
          _
        %305 = shalt.err (0)
        %s307 = sshll.u32 %s298, 4
        %s308 = int_to_ptr.vmem [resolvable:$true] %s307
        %310 = dma.hbm_to_vmem [thread:$0]  %s297, 16, %s308, %s299
        %s311 = sadd.s32 %s228, 5
        %s312 = sld [smem:[#allocation5 + %s311]]
        %s313 = smul.addr %s312, 16
        %s314 = scalar_lea.hbm %s2, %s313
        %s315 = scalar_lea.vmem [#allocation2], 5
        %s316 = scalar_lea.sflag [#allocation3], 5
        // Predicated region
        $region61: #{tpu_custom_call.1} parent=39 // pred_check
          _
        $region62: #{tpu_custom_call.1} parent=39 // pred_check_branch
          %318 = sbr.rel target = $region64
        $region63: #{tpu_custom_call.1} parent=39 // pred_region
          %319 = sst [smem:[#allocation10]] [#allocation21]
          %320 = sst [smem:[#allocation11]] [#allocation20]
        $region64: #{tpu_custom_call.1} parent=39 // pred_fallthru
          _
        %322 = shalt.err (0)
        %s324 = sshll.u32 %s315, 4
        %s325 = int_to_ptr.vmem [resolvable:$true] %s324
        %327 = dma.hbm_to_vmem [thread:$0]  %s314, 16, %s325, %s316
        %s328 = sadd.s32 %s228, 6
        %s329 = sld [smem:[#allocation5 + %s328]]
        %s330 = smul.addr %s329, 16
        %s331 = scalar_lea.hbm %s2, %s330
        %s332 = scalar_lea.vmem [#allocation2], 6
        %s333 = scalar_lea.sflag [#allocation3], 6
        // Predicated region
        $region65: #{tpu_custom_call.1} parent=39 // pred_check
          _
        $region66: #{tpu_custom_call.1} parent=39 // pred_check_branch
          %335 = sbr.rel target = $region68
        $region67: #{tpu_custom_call.1} parent=39 // pred_region
          %336 = sst [smem:[#allocation10]] [#allocation23]
          %337 = sst [smem:[#allocation11]] [#allocation22]
        $region68: #{tpu_custom_call.1} parent=39 // pred_fallthru
          _
        %339 = shalt.err (0)
        %s341 = sshll.u32 %s332, 4
        %s342 = int_to_ptr.vmem [resolvable:$true] %s341
        %344 = dma.hbm_to_vmem [thread:$0]  %s331, 16, %s342, %s333
        %s345 = sadd.s32 %s228, 7
        %s346 = sld [smem:[#allocation5 + %s345]]
        %s347 = smul.addr %s346, 16
        %s348 = scalar_lea.hbm %s2, %s347
        %s349 = scalar_lea.vmem [#allocation2], 7
        %s350 = scalar_lea.sflag [#allocation3], 7
        // Predicated region
        $region69: #{tpu_custom_call.1} parent=39 // pred_check
          _
        $region70: #{tpu_custom_call.1} parent=39 // pred_check_branch
          %352 = sbr.rel target = $region72
        $region71: #{tpu_custom_call.1} parent=39 // pred_region
          %353 = sst [smem:[#allocation10]] [#allocation25]
          %354 = sst [smem:[#allocation11]] [#allocation24]
        $region72: #{tpu_custom_call.1} parent=39 // pred_fallthru
          _
        %356 = shalt.err (0)
        %s358 = sshll.u32 %s349, 4
        %s359 = int_to_ptr.vmem [resolvable:$true] %s358
        %361 = dma.hbm_to_vmem [thread:$0]  %s348, 16, %s359, %s350
        %363 = dma.done [#allocation3], 16
        %365 = dma.done %s248, 16
        %367 = dma.done %s265, 16
        %369 = dma.done %s282, 16
        %371 = dma.done %s299, 16
        %373 = dma.done %s316, 16
        %375 = dma.done %s333, 16
        %377 = dma.done %s350, 16
        %v378 = vld [vmem:[#allocation2] sm:$0xff]
        %v379 = vld [vmem:[%s3] sm:$0xff]
        %v380 = vld [vmem:[%s4] sm:$0x1]
        %v381 = vld [vmem:[%s4 + $0x1] sm:$0x1]
        %v382 = vld [vmem:[%s227] sm:$0xff]
        %vm383 = vcmp.eq.s32.totalorder %v382, 1
        %v384 = vsel %vm383, 1, 0
        %385 = vset.pattern.permute.xlu0 0
        %386 = vperm.xlu0 %385, %v384
        %v387 = vpop.permute.xlu0 %386
        %vm388 = vcmp.eq.s32.totalorder %v387, 1
        %v389 = vlaneseq
        %v390 = vshrl.u32 %v389, 7
        %v391 = vsub.s32 0, %v390
        %v392 = vrot.slane %v381, %v391
        %v393 = vlaneseq
        %v394 = vshrl.u32 %v393, 7
        %v395 = vsub.s32 0, %v394
        %v396 = vrot.slane %v380, %v395
        %v397 = vsel %vm388, %v392, %v396
        %v398 = vadd.f32 %v378, %v379
        %v399 = vadd.f32 %v398, %v397
        %400 = vadd.xlane.f32.xlu0 %v399
        %v401 = vpop.xlane.xlu0 %400
        %v402 = vrcp.pop 128.0
        %v403 = vmul.f32 %v401, %v402
        %v404 = vsub.f32 %v399, %v403
        %v405 = vmul.f32 %v404, %v404
        %406 = vadd.xlane.f32.xlu0 %v405
        %v407 = vpop.xlane.xlu0 %406
        %v408 = vmul.f32 %v407, %v402
        %v409 = vadd.f32 %v408, 1e-12
        %v410 = vrsqrt.pop %v409
        %v411 = vmul.f32 %v404, %v410
        %v412 = vld [vmem:[%s5] sm:$0x1]
        %v414 = vlaneseq
        %v415 = vshrl.u32 %v414, 7
        %v416 = vsub.s32 0, %v415
        %v417 = vrot.slane %v412, %v416
        %v419 = vmul.f32 %v411, %v417
        %v420 = vld [vmem:[%s6] sm:$0x1]
        %v422 = vlaneseq
        %v423 = vshrl.u32 %v422, 7
        %v424 = vsub.s32 0, %v423
        %v425 = vrot.slane %v420, %v424
        %v427 = vadd.f32 %v419, %v425
        %428 = vst [vmem:[%s223] sm:$0xff] %v427
        %s429 = sand.u32 %s145, 1
        %s430 = scalar_lea.sflag [#allocation7], %s429
        %s431 = sand.u32 %s145, 1
        %s432 = smul.addr %s431, 8
        %s433 = scalar_lea.vmem [#allocation6], %s432
        // Predicated region
        $region73: #{tpu_custom_call.1} parent=39 // pred_check
          %p434 = pneg %p155
        $region74: #{tpu_custom_call.1} parent=39 // pred_check_branch
          %436 = sbr.rel (%p434) target = $region76
        $region75: #{tpu_custom_call.1} parent=39 // pred_region
          %s438 = ssub.s32 128, 128
          %439 = vsyncadd %s430, %s438
          %s440 = smul.addr %s27, 128
          %s441 = scalar_lea.hbm %s7, %s440
          %s443 = sshll.u32 %s433, 4
          %s444 = int_to_ptr.vmem [resolvable:$true] %s443
          %446 = dma.vmem_to_hbm [thread:$0]  %s444, 128, %s441, %s430
        $region76: #{tpu_custom_call.1} parent=39 // pred_fallthru
          _
      $region40: #{tpu_custom_call.1} parent=5 // pred_fallthru
        _
      %p447 = scmp.le.s32.totalorder 2, %s22
      // Predicated region
      $region77: #{tpu_custom_call.1} parent=5 // pred_check
        %p448 = pneg %p447
      $region78: #{tpu_custom_call.1} parent=5 // pred_check_branch
        %450 = sbr.rel (%p448) target = $region80
      $region79: #{tpu_custom_call.1} parent=5 // pred_region
        %s451 = ssub.s32 %s22, 2
        // Predicated region
        $region81: #{tpu_custom_call.1} parent=79 // pred_check
          %p452 = pneg %p161
        $region82: #{tpu_custom_call.1} parent=79 // pred_check_branch
          %454 = sbr.rel (%p452) target = $region84
        $region83: #{tpu_custom_call.1} parent=79 // pred_region
          %s455 = sand.u32 %s146, 1
          %s456 = scalar_lea.sflag [#allocation7], %s455
          %s457 = sand.u32 %s146, 1
          %s458 = smul.addr %s457, 8
          %s459 = scalar_lea.vmem [#allocation6], %s458
          %460 = dma.done %s456, 128
        $region84: #{tpu_custom_call.1} parent=79 // pred_fallthru
          _
      $region80: #{tpu_custom_call.1} parent=5 // pred_fallthru
        _
    $region6: #{tpu_custom_call.1} parent=1 // loop_footer
      %s26 = sadd.s32 1, %s22
    $region7: #{tpu_custom_call.1} parent=1 // loop_footer_branch
      %21 = sbr.rel target = $region3
    $region8: #{tpu_custom_call.1} parent=1 // loop_exit
      _
    %461 = vsyncpa [#allocation7], 1
    %s462 = scalar_lea.sflag [#allocation7], 1
    %463 = vsyncpa %s462, 1
  %464 = vsyncmov [#allocation3]
  %s465 = vpop.sfrf %464
  %p466 = scmp.eq.s32.totalorder %s465, 0
  %p467 = pneg %p466
  %469 = shalt.err (%p467)
  %s470 = scalar_lea.sflag [#allocation3], 1
  %471 = vsyncmov %s470
  %s472 = vpop.sfrf %471
  %p473 = scmp.eq.s32.totalorder %s472, 0
  %p474 = pneg %p473
  %476 = shalt.err (%p474)
  %s477 = scalar_lea.sflag [#allocation3], 2
  %478 = vsyncmov %s477
  %s479 = vpop.sfrf %478
  %p480 = scmp.eq.s32.totalorder %s479, 0
  %p481 = pneg %p480
  %483 = shalt.err (%p481)
  %s484 = scalar_lea.sflag [#allocation3], 3
  %485 = vsyncmov %s484
  %s486 = vpop.sfrf %485
  %p487 = scmp.eq.s32.totalorder %s486, 0
  %p488 = pneg %p487
  %490 = shalt.err (%p488)
  %s491 = scalar_lea.sflag [#allocation3], 4
  %492 = vsyncmov %s491
  %s493 = vpop.sfrf %492
  %p494 = scmp.eq.s32.totalorder %s493, 0
  %p495 = pneg %p494
  %497 = shalt.err (%p495)
  %s498 = scalar_lea.sflag [#allocation3], 5
  %499 = vsyncmov %s498
  %s500 = vpop.sfrf %499
  %p501 = scmp.eq.s32.totalorder %s500, 0
  %p502 = pneg %p501
  %504 = shalt.err (%p502)
  %s505 = scalar_lea.sflag [#allocation3], 6
  %506 = vsyncmov %s505
  %s507 = vpop.sfrf %506
  %p508 = scmp.eq.s32.totalorder %s507, 0
  %p509 = pneg %p508
  %511 = shalt.err (%p509)
  %s512 = scalar_lea.sflag [#allocation3], 7
  %513 = vsyncmov %s512
  %s514 = vpop.sfrf %513
  %p515 = scmp.eq.s32.totalorder %s514, 0
  %p516 = pneg %p515
  %518 = shalt.err (%p516)

</llo_original>
